<compile_context>
chip_gen: v6e
topology: v6e:2x2x1
jax: 0.10.0
libtpu: 0.0.40
codegen_flags: <defaults>
</compile_context>

<pallas_src>
import jax
import jax.numpy as jnp
from jax.experimental import pallas as pl
from jax.experimental.pallas import tpu as pltpu


def _round_up(n: int, m: int) -> int:
    return ((n + m - 1) // m) * m


def _fold_coefficients(k, true_A):
    # out[:, j] = Ca * (k0*A[0,j]) + Cb * (k1*A[1,j] + k2*A[2,j])
    ka = k.astype(jnp.float32)[:, None] * true_A.astype(jnp.float32)   # (3, 3)
    return jnp.stack([ka[0, :], ka[1, :] + ka[2, :]], axis=0)          # (2, 3)


def lambda_kernel(coef_ref, xt_ref, ot_ref):
    # coef_ref: (2, 3) f32 in SMEM.
    # xt_ref:   (2, rb, 128) f32 in VMEM -- xt_ref[0] = Ca, xt_ref[1] = Cb,
    #           batch dense across sublanes AND lanes.
    # ot_ref:   (3, rb, 128) f32 in VMEM -- out^T block.
    ca = xt_ref[0]                                  # (rb, 128), fully dense
    cb = xt_ref[1]
    # Direct per-row stores (no concat temp, full unmasked vst slabs).
    ot_ref[0] = coef_ref[0, 0] * ca + coef_ref[1, 0] * cb
    ot_ref[1] = coef_ref[0, 1] * ca + coef_ref[1, 1] * cb
    ot_ref[2] = coef_ref[0, 2] * ca + coef_ref[1, 2] * cb


def lambda_forward_transposed(xT, k, true_A, *, block_b=262144):
    """Transposed interface: xT is (2, B) f32 (row 0 = Ca, row 1 = Cb).

    Returns out^T of shape (3, B).  Callers that can supply/consume the
    transposed layout avoid all wrapper-side transposes.
    """
    coef = _fold_coefficients(k, true_A)
    B = int(xT.shape[1])

    # Pad only to the 128-lane width (cheap), never to a full tile.
    B_pad = _round_up(max(B, 1), 128)
    xT = xT.astype(jnp.float32)
    if B_pad != B:
        xT = jnp.pad(xT, ((0, 0), (0, B_pad - B)))
    R = B_pad // 128
    x3 = xT.reshape(2, R, 128)                      # free row-major reshape

    # Rows-per-block: block_b (batch elems) rounded to a multiple of 8*128 so
    # the sublane dim of the block is a multiple of 8; single full-extent
    # block for small batches; otherwise >=2 blocks so both v7x TCs get work.
    rb_target = max(8, _round_up(block_b, 1024) // 128)
    if R <= rb_target:
        rb = R                                      # single block == full extent
    else:
        rb = min(rb_target, _round_up(pl.cdiv(R, 2), 8))
        rb = max(8, (rb // 8) * 8)
    grid = (pl.cdiv(R, rb),)                        # ragged tail handled by Pallas

    out3 = pl.pallas_call(
        lambda_kernel,
        out_shape=jax.ShapeDtypeStruct((3, R, 128), jnp.float32),
        grid_spec=pltpu.PrefetchScalarGridSpec(
            num_scalar_prefetch=0,
            grid=grid,
            in_specs=[
                pl.BlockSpec(memory_space=pltpu.MemorySpace.SMEM),   # coef (2, 3)
                pl.BlockSpec((2, rb, 128), lambda i: (0, i, 0)),     # x^T block
            ],
            out_specs=pl.BlockSpec((3, rb, 128), lambda i: (0, i, 0)),
        ),
        compiler_params=pltpu.CompilerParams(
            dimension_semantics=("parallel",)),
        cost_estimate=pl.CostEstimate(
            flops=9 * B, transcendentals=0, bytes_accessed=20 * B),
    )(coef, x3)

    return out3.reshape(3, B_pad)[:, :B]            # (3, B)


def lambda_forward(N_t, x, k, true_A, z=0, t=0, *, block_b=262144):
    """Reproduces Lambda.forward: x (B, F) -> (B, 3).  N_t, z, t unused (as in the module)."""
    del N_t, z, t
    # Single fused slice+cast+transpose on the way in; single transpose out.
    # (Use lambda_forward_transposed directly to avoid these entirely.)
    xT = x[:, :2].astype(jnp.float32).T             # (2, B)
    return lambda_forward_transposed(xT, k, true_A, block_b=block_b).T


def _reference(x, k, true_A):
    terms = jnp.stack((x[:, 0], x[:, 1], x[:, 1]), axis=1)
    return (terms * k.astype(jnp.float32)) @ true_A.astype(jnp.float32)


if __name__ == "__main__":
    # Parameters exactly as in the module's globals.
    k = jnp.array([0.1, 0.06, 0.03], dtype=jnp.float32)
    true_A = jnp.array([[-1.0, 1.0, 0.0],
                        [1.0, -1.0, -2.0],
                        [0.0, 0.0, 1.0]], dtype=jnp.float32).T

    key = jax.random.PRNGKey(0)

    # --- Small deterministic case (single 128-lane block) --------------------
    B, F = 8, 3
    x = jax.random.uniform(key, (B, F), dtype=jnp.float32)
    N_t = jnp.zeros((B,), dtype=jnp.float32)        # unused by forward
    out = jax.block_until_ready(lambda_forward(N_t, x, k, true_A))
    ref = _reference(x, k, true_A)
    assert out.shape == (B, 3) and out.dtype == jnp.float32
    assert jnp.allclose(out, ref, atol=1e-6, rtol=1e-6)

    # --- Larger case: multi-block grid + lane padding + ragged tail block ----
    B2, F2 = 3900, 5                                # only cols 0,1 are read
    x2 = jax.random.normal(jax.random.PRNGKey(1), (B2, F2), dtype=jnp.float32)
    out2 = jax.block_until_ready(
        lambda_forward(jnp.zeros((B2,), jnp.float32), x2, k, true_A, block_b=1024))
    ref2 = _reference(x2, k, true_A)
    assert out2.shape == (B2, 3) and out2.dtype == jnp.float32
    assert jnp.allclose(out2, ref2, atol=1e-5, rtol=1e-5)

    print("KERNEL_OK")
</pallas_src>

<mosaic_0001>
module attributes {stable_mosaic.version = 11 : i64} {
  func.func @lambda_kernel(%arg0: i32, %arg1: memref<2x3xf32, #tpu.memory_space<smem>>, %arg2: memref<2x1x128xf32, #tpu.memory_space<vmem>>, %arg3: memref<3x1x128xf32, #tpu.memory_space<vmem>>) attributes {dimension_semantics = [#tpu.dimension_semantics<parallel>], iteration_bounds = array<i64: 1>, scalar_prefetch = 0 : i64, scratch_operands = 0 : i64, tpu.core_type = #tpu.core_type<tc>, window_params = [{transform_indices = @transform_0, window_bounds = array<i64: 2, 3>}, {transform_indices = @transform_1, window_bounds = array<i64: 2, 1, 128>}, {transform_indices = @transform_2, window_bounds = array<i64: 3, 1, 128>}]} {
    %c0 = arith.constant 0 : index
    %c0_0 = arith.constant 0 : index
    %c0_1 = arith.constant 0 : index
    %0 = vector.load %arg2[%c0, %c0_0, %c0_1] : memref<2x1x128xf32, #tpu.memory_space<vmem>>, vector<1x1x128xf32>
    %1 = vector.shape_cast %0 : vector<1x1x128xf32> to vector<1x128xf32>
    %c1 = arith.constant 1 : index
    %c0_2 = arith.constant 0 : index
    %c0_3 = arith.constant 0 : index
    %2 = vector.load %arg2[%c1, %c0_2, %c0_3] : memref<2x1x128xf32, #tpu.memory_space<vmem>>, vector<1x1x128xf32>
    %3 = vector.shape_cast %2 : vector<1x1x128xf32> to vector<1x128xf32>
    %c0_4 = arith.constant 0 : index
    %c0_5 = arith.constant 0 : index
    %4 = memref.load %arg1[%c0_4, %c0_5] : memref<2x3xf32, #tpu.memory_space<smem>>
    %5 = vector.broadcast %4 : f32 to vector<1x128xf32>
    %6 = arith.mulf %5, %1 : vector<1x128xf32>
    %c1_6 = arith.constant 1 : index
    %c0_7 = arith.constant 0 : index
    %7 = memref.load %arg1[%c1_6, %c0_7] : memref<2x3xf32, #tpu.memory_space<smem>>
    %8 = vector.broadcast %7 : f32 to vector<1x128xf32>
    %9 = arith.mulf %8, %3 : vector<1x128xf32>
    %10 = arith.addf %6, %9 : vector<1x128xf32>
    %c0_8 = arith.constant 0 : index
    %c0_9 = arith.constant 0 : index
    %c0_10 = arith.constant 0 : index
    %11 = vector.load %arg3[%c0_8, %c0_9, %c0_10] : memref<3x1x128xf32, #tpu.memory_space<vmem>>, vector<1x1x128xf32>
    %12 = vector.shape_cast %11 : vector<1x1x128xf32> to vector<1x128xf32>
    %13 = vector.shape_cast %10 : vector<1x128xf32> to vector<1x1x128xf32>
    tpu.vector_store %arg3[%c0_8, %c0_9, %c0_10], %13 {strides = array<i32>} : memref<3x1x128xf32, #tpu.memory_space<vmem>>, vector<1x1x128xf32>,
    %c0_11 = arith.constant 0 : index
    %c1_12 = arith.constant 1 : index
    %14 = memref.load %arg1[%c0_11, %c1_12] : memref<2x3xf32, #tpu.memory_space<smem>>
    %15 = vector.broadcast %14 : f32 to vector<1x128xf32>
    %16 = arith.mulf %15, %1 : vector<1x128xf32>
    %c1_13 = arith.constant 1 : index
    %c1_14 = arith.constant 1 : index
    %17 = memref.load %arg1[%c1_13, %c1_14] : memref<2x3xf32, #tpu.memory_space<smem>>
    %18 = vector.broadcast %17 : f32 to vector<1x128xf32>
    %19 = arith.mulf %18, %3 : vector<1x128xf32>
    %20 = arith.addf %16, %19 : vector<1x128xf32>
    %c1_15 = arith.constant 1 : index
    %c0_16 = arith.constant 0 : index
    %c0_17 = arith.constant 0 : index
    %21 = vector.load %arg3[%c1_15, %c0_16, %c0_17] : memref<3x1x128xf32, #tpu.memory_space<vmem>>, vector<1x1x128xf32>
    %22 = vector.shape_cast %21 : vector<1x1x128xf32> to vector<1x128xf32>
    %23 = vector.shape_cast %20 : vector<1x128xf32> to vector<1x1x128xf32>
    tpu.vector_store %arg3[%c1_15, %c0_16, %c0_17], %23 {strides = array<i32>} : memref<3x1x128xf32, #tpu.memory_space<vmem>>, vector<1x1x128xf32>,
    %c0_18 = arith.constant 0 : index
    %c2 = arith.constant 2 : index
    %24 = memref.load %arg1[%c0_18, %c2] : memref<2x3xf32, #tpu.memory_space<smem>>
    %25 = vector.broadcast %24 : f32 to vector<1x128xf32>
    %26 = arith.mulf %25, %1 : vector<1x128xf32>
    %c1_19 = arith.constant 1 : index
    %c2_20 = arith.constant 2 : index
    %27 = memref.load %arg1[%c1_19, %c2_20] : memref<2x3xf32, #tpu.memory_space<smem>>
    %28 = vector.broadcast %27 : f32 to vector<1x128xf32>
    %29 = arith.mulf %28, %3 : vector<1x128xf32>
    %30 = arith.addf %26, %29 : vector<1x128xf32>
    %c2_21 = arith.constant 2 : index
    %c0_22 = arith.constant 0 : index
    %c0_23 = arith.constant 0 : index
    %31 = vector.load %arg3[%c2_21, %c0_22, %c0_23] : memref<3x1x128xf32, #tpu.memory_space<vmem>>, vector<1x1x128xf32>
    %32 = vector.shape_cast %31 : vector<1x1x128xf32> to vector<1x128xf32>
    %33 = vector.shape_cast %30 : vector<1x128xf32> to vector<1x1x128xf32>
    tpu.vector_store %arg3[%c2_21, %c0_22, %c0_23], %33 {strides = array<i32>} : memref<3x1x128xf32, #tpu.memory_space<vmem>>, vector<1x1x128xf32>,
    return
  }
  func.func @transform_0(%arg0: i32) -> (i32, i32) {
    %c0_i32 = arith.constant 0 : i32
    %c0_i32_0 = arith.constant 0 : i32
    %c0_i32_1 = arith.constant 0 : i32
    return %c0_i32, %c0_i32_0 : i32, i32
  }
  func.func @transform_1(%arg0: i32) -> (i32, i32, i32) {
    %c0_i32 = arith.constant 0 : i32
    %c0_i32_0 = arith.constant 0 : i32
    %c0_i32_1 = arith.constant 0 : i32
    return %c0_i32, %arg0, %c0_i32_0 : i32, i32, i32
  }
  func.func @transform_2(%arg0: i32) -> (i32, i32, i32) {
    %c0_i32 = arith.constant 0 : i32
    %c0_i32_0 = arith.constant 0 : i32
    %c0_i32_1 = arith.constant 0 : i32
    return %c0_i32, %arg0, %c0_i32_0 : i32, i32, i32
  }
}

</mosaic_0001>

<llo_original>
// kernel: tpu_custom_call.1
$region0: #{tpu_custom_call.1}
  #allocation0 [shape = 'u32[]', space=smem, size = 0x4, offset = 0x4, fixed_abs, tag = 'smem constant byte address 0x4 - core index']
  #allocation1 [shape = 'u32[144,128]{1,0:T(1,128)}', space=vmem, size = 0x12000, scoped, tag = 'internal scratch']
  %s0 = inlined_call_operand.hbm [shape: f32[2,3], index: 0, kind: input, shape index: {}]
  %s1 = inlined_call_operand.hbm [shape: f32[2,1,128], index: 1, kind: input, shape index: {}]
  %s2 = inlined_call_operand.hbm [shape: f32[3,1,128], index: 2, kind: output, shape index: {}]
  %s3 = sld [smem:[#allocation0]]
  $region26: #{tpu_custom_call.1} parent=0
    _
  %s5 = ssub.s32 1, %s3
  %s6 = scalar_select 0, %s5, %s3
  $region1: #{tpu_custom_call.1} parent=0
    #allocation2 [shape = 'u8[1024]{0}', space=smem, size = 0x400, scoped, tag = 'input window, operand 0, single buffered']
    #allocation3 [shape = 's32[1]{0}', space=sflag, size = 0x4, scoped, tag = 'scoped memory for tpu_custom_call.1']
    #allocation4 [shape = 's32[1]{0}', space=sflag, size = 0x4, scoped, tag = 'scoped memory for tpu_custom_call.1']
    #allocation5 [shape = 's32[1]{0}', space=sflag, size = 0x4, scoped, tag = 'scoped memory for tpu_custom_call.1']
    #allocation6 [shape = 'u8[1024]{0}', space=vmem, size = 0x400, scoped, tag = 'input window, operand 1, single buffered']
    #allocation7 [shape = 'u8[1536]{0}', space=vmem, size = 0x800, scoped, tag = 'output window, operand 0, single buffered']
    %7 = vsyncpa [#allocation5], 0
    %8 = vsyncpa [#allocation3], 0
    %9 = vsyncpa [#allocation4], 0
    // Predicated region
    $region2: #{tpu_custom_call.1} parent=1 // pred_check
      _
    $region3: #{tpu_custom_call.1} parent=1 // pred_check_branch
      %11 = sbr.rel (0) target = $region5
    $region4: #{tpu_custom_call.1} parent=1 // pred_region
      %s13 = ssub.s32 32, 32
      %14 = vsyncadd [#allocation5], %s13
      %17 = dma.hbm_to_smem %s0, 32, [#allocation2], [#allocation5]
    $region5: #{tpu_custom_call.1} parent=1 // pred_fallthru
      _
    // Predicated region
    $region6: #{tpu_custom_call.1} parent=1 // pred_check
      _
    $region7: #{tpu_custom_call.1} parent=1 // pred_check_branch
      %19 = sbr.rel (0) target = $region9
    $region8: #{tpu_custom_call.1} parent=1 // pred_region
      %s21 = ssub.s32 32, 32
      %22 = vsyncadd [#allocation3], %s21
      %s23 = sshll.u32 [#allocation6], 4
      %s24 = int_to_ptr.vmem [resolvable:$true] %s23
      %29 = dma.hbm_to_vmem [thread:$0]  %s1, 32, %s24, [#allocation3], 16, 16, 1
    $region9: #{tpu_custom_call.1} parent=1 // pred_fallthru
      _
    // Predicated region
    $region10: #{tpu_custom_call.1} parent=1 // pred_check
      _
    $region11: #{tpu_custom_call.1} parent=1 // pred_check_branch
      %31 = sbr.rel (0) target = $region13
    $region12: #{tpu_custom_call.1} parent=1 // pred_region
      %32 = dma.done [#allocation5], 32
    $region13: #{tpu_custom_call.1} parent=1 // pred_fallthru
      _
    // Predicated region
    $region14: #{tpu_custom_call.1} parent=1 // pred_check
      _
    $region15: #{tpu_custom_call.1} parent=1 // pred_check_branch
      %34 = sbr.rel (0) target = $region17
    $region16: #{tpu_custom_call.1} parent=1 // pred_region
      %35 = dma.done [#allocation3], 32
    $region17: #{tpu_custom_call.1} parent=1 // pred_fallthru
      _
    %36 = sfence
    %v37 = vld [vmem:[#allocation6] sm:$0x1]
    %s38 = scalar_lea.vmem [#allocation6], 1
    %v39 = vld [vmem:[%s38] sm:$0x1]
    %s40 = sld [smem:[#allocation2]]
    %v41 = vstv %s40
    %v42 = vmul.f32 %v41, %v37
    %s43 = sld [smem:[#allocation2 + $0x80]]
    %v44 = vstv %s43
    %v45 = vmul.f32 %v44, %v39
    %v46 = vadd.f32 %v42, %v45
    %47 = vst [vmem:[#allocation7] sm:$0x1] %v46
    %s48 = sld [smem:[#allocation2 + $0x1]]
    %v49 = vstv %s48
    %v50 = vmul.f32 %v49, %v37
    %s51 = sld [smem:[#allocation2 + $0x81]]
    %v52 = vstv %s51
    %v53 = vmul.f32 %v52, %v39
    %v54 = vadd.f32 %v50, %v53
    %s55 = scalar_lea.vmem [#allocation7], 1
    %56 = vst [vmem:[%s55] sm:$0x1] %v54
    %s57 = sld [smem:[#allocation2 + $0x2]]
    %v58 = vstv %s57
    %v59 = vmul.f32 %v58, %v37
    %s60 = sld [smem:[#allocation2 + $0x82]]
    %v61 = vstv %s60
    %v62 = vmul.f32 %v61, %v39
    %v63 = vadd.f32 %v59, %v62
    %s64 = scalar_lea.vmem [#allocation7], 2
    %65 = vst [vmem:[%s64] sm:$0x1] %v63
    // Predicated region
    $region18: #{tpu_custom_call.1} parent=1 // pred_check
      _
    $region19: #{tpu_custom_call.1} parent=1 // pred_check_branch
      %67 = sbr.rel (0) target = $region21
    $region20: #{tpu_custom_call.1} parent=1 // pred_region
      %s69 = ssub.s32 48, 48
      %70 = vsyncadd [#allocation4], %s69
      %s71 = sshll.u32 [#allocation7], 4
      %s72 = int_to_ptr.vmem [resolvable:$true] %s71
      %77 = dma.vmem_to_hbm [thread:$0]  %s72, 48, %s2, [#allocation4], 16, 16, 1
    $region21: #{tpu_custom_call.1} parent=1 // pred_fallthru
      _
    // Predicated region
    $region22: #{tpu_custom_call.1} parent=1 // pred_check
      _
    $region23: #{tpu_custom_call.1} parent=1 // pred_check_branch
      %79 = sbr.rel (0) target = $region25
    $region24: #{tpu_custom_call.1} parent=1 // pred_region
      %80 = dma.done [#allocation4], 48
    $region25: #{tpu_custom_call.1} parent=1 // pred_fallthru
      _
    %81 = vsyncpa [#allocation3], 1
    %82 = vsyncpa [#allocation4], 1
    %83 = vsyncpa [#allocation5], 1

</llo_original>
